<compile_context>
chip_gen: v7x
topology: tpu7x:2x2x1
jax: 0.10.0
libtpu: 0.0.40
codegen_flags: <defaults>
</compile_context>

<pallas_src>
import functools

import jax
import jax.numpy as jnp
from jax.experimental import pallas as pl
from jax.experimental.pallas import tpu as pltpu

LANE = 128
SUBLANE = 8


def _round_up(n, m):
    return ((n + m - 1) // m) * m


def _pad_to(a, shape):
    pads = [(0, t - s) for s, t in zip(a.shape, shape)]
    if all(p == (0, 0) for p in pads):
        return a
    return jnp.pad(a, pads)


def mlp_kernel(x_ref, w1_ref, b1_ref, w2_ref, b2_ref, w3_ref, b3_ref, o_ref,
               *, bf16_epilogue):
    # Layer 1: cast the raw f32 x tile to bf16 in-kernel (no wrapper pad/cast pass),
    # MXU matmul with f32 accumulation.
    x = x_ref[...].astype(jnp.bfloat16)
    h1 = jnp.dot(x, w1_ref[...], preferred_element_type=jnp.float32)
    if bf16_epilogue:  # v6e / v7x: bf16 VPU -> bf16 bias-add + ReLU
        h1 = jnp.maximum(h1.astype(jnp.bfloat16) + b1_ref[...], 0)
    else:              # v5e: no bf16 VPU -> keep epilogue in f32
        h1 = jnp.maximum(h1 + b1_ref[...], 0.0).astype(jnp.bfloat16)

    # Layer 2: Linear + ReLU.
    h2 = jnp.dot(h1, w2_ref[...], preferred_element_type=jnp.float32)
    if bf16_epilogue:
        h2 = jnp.maximum(h2.astype(jnp.bfloat16) + b2_ref[...], 0)
    else:
        h2 = jnp.maximum(h2 + b2_ref[...], 0.0).astype(jnp.bfloat16)

    # Layer 3: Linear (logits, no activation). Output stays f32 (module semantics),
    # lane-dense (128-wide) unmasked store.
    out = jnp.dot(h2, w3_ref[...], preferred_element_type=jnp.float32)
    o_ref[...] = (out + b3_ref[...]).astype(o_ref.dtype)


@functools.partial(jax.jit, static_argnames=("tm", "bf16_epilogue"))
def mlp_forward(x, w1, b1, w2, b2, w3, b3, *, tm=1024, bf16_epilogue=False):
    """x: (B, F) f32; w_i: (in, out) f32 (== PyTorch weight.T); b_i: (1, out) f32."""
    B, F = x.shape
    H1, H2, C = w1.shape[1], w2.shape[1], w3.shape[1]

    # Lane-dense padding for the hidden / class dims (feature dim of x is NOT padded).
    H1p, H2p, Cp = (_round_up(d, LANE) for d in (H1, H2, C))

    # Batch tiling: big tiles amortize per-step overhead; keep >=2 grid steps when the
    # batch allows it (v7x megacore); round TM to the sublane (8) and pick it from the
    # step count so batch over-padding is at most G*(SUBLANE-1).
    B8 = _round_up(B, SUBLANE)
    G = pl.cdiv(B8, tm)
    if B8 >= 2 * SUBLANE:
        G = max(G, 2)
    TM = _round_up(pl.cdiv(B8, G), SUBLANE)
    G = pl.cdiv(B8, TM)
    Bp = G * TM

    # x: only batch-padded, raw f32 (cast to bf16 happens inside the kernel).
    xp = _pad_to(x, (Bp, F))
    # Weights / biases are tiny and VMEM-resident: pad lane dims and pre-cast once.
    ep_dtype = jnp.bfloat16 if bf16_epilogue else jnp.float32
    w1p = _pad_to(w1, (F, H1p)).astype(jnp.bfloat16)
    w2p = _pad_to(w2, (H1p, H2p)).astype(jnp.bfloat16)
    w3p = _pad_to(w3, (H2p, Cp)).astype(jnp.bfloat16)
    b1p = _pad_to(b1, (1, H1p)).astype(ep_dtype)
    b2p = _pad_to(b2, (1, H2p)).astype(ep_dtype)
    b3p = _pad_to(b3, (1, Cp)).astype(jnp.float32)

    tiled = lambda r, c: pl.BlockSpec((r, c), lambda i: (i, 0))      # batch-tiled, pipelined
    resident = lambda shape: pl.BlockSpec(shape, lambda i: (0, 0))   # constant index -> VMEM-resident

    # Cost estimate from true dims (flops) and the bytes the kernel actually moves.
    flops = 2 * B * (F * H1 + H1 * H2 + H2 * C)
    bytes_accessed = (
        Bp * F * 4                                    # x (f32, unpadded features)
        + (w1p.size + w2p.size + w3p.size) * 2        # resident bf16 weights (read once)
        + b1p.size * b1p.dtype.itemsize
        + b2p.size * b2p.dtype.itemsize
        + b3p.size * 4
        + Bp * Cp * 4                                 # lane-dense f32 output writeback
    )

    kernel = functools.partial(mlp_kernel, bf16_epilogue=bf16_epilogue)

    out = pl.pallas_call(
        kernel,
        out_shape=jax.ShapeDtypeStruct((Bp, Cp), jnp.float32),
        grid_spec=pltpu.PrefetchScalarGridSpec(
            num_scalar_prefetch=0,
            grid=(G,),
            in_specs=[
                tiled(TM, F),
                resident((F, H1p)), resident((1, H1p)),
                resident((H1p, H2p)), resident((1, H2p)),
                resident((H2p, Cp)), resident((1, Cp)),
            ],
            out_specs=tiled(TM, Cp),
        ),
        compiler_params=pltpu.CompilerParams(dimension_semantics=("parallel",)),
        cost_estimate=pl.CostEstimate(
            flops=flops, transcendentals=0, bytes_accessed=bytes_accessed),
    )(xp, w1p, b1p, w2p, b2p, w3p, b3p)

    return out[:B, :C]


def default_bf16_epilogue():
    """bf16 bias/ReLU epilogue only where the VPU supports bf16 (v6e / v7x)."""
    try:
        kind = jax.devices()[0].device_kind.lower()
    except Exception:
        return False
    return any(tag in kind for tag in ("v6", "v7", "7x"))


def init_params(key, num_features, num_hidden_1, num_hidden_2, num_classes):
    """Deterministic synthetic parameters (nn.Linear-equivalent, stored transposed)."""
    ks = jax.random.split(key, 6)

    def lin(kw, kb, fan_in, fan_out):
        bound = 1.0 / jnp.sqrt(fan_in)
        w = jax.random.uniform(kw, (fan_in, fan_out), jnp.float32, -bound, bound)
        b = jax.random.uniform(kb, (1, fan_out), jnp.float32, -bound, bound)
        return w, b

    w1, b1 = lin(ks[0], ks[1], num_features, num_hidden_1)
    w2, b2 = lin(ks[2], ks[3], num_hidden_1, num_hidden_2)
    w3, b3 = lin(ks[4], ks[5], num_hidden_2, num_classes)
    return w1, b1, w2, b2, w3, b3


def emulate_kernel_math(x, params, bf16_ep):
    """Pure-JAX reference with the same bf16-operand / f32-accumulate math as the kernel."""
    w1, b1, w2, b2, w3, b3 = params
    bf = lambda a: a.astype(jnp.bfloat16)
    h = jnp.dot(bf(x), bf(w1), preferred_element_type=jnp.float32)
    h = jnp.maximum(bf(h) + bf(b1), 0) if bf16_ep else bf(jnp.maximum(h + b1, 0.0))
    h = jnp.dot(bf(h), bf(w2), preferred_element_type=jnp.float32)
    h = jnp.maximum(bf(h) + bf(b2), 0) if bf16_ep else bf(jnp.maximum(h + b2, 0.0))
    return jnp.dot(bf(h), bf(w3), preferred_element_type=jnp.float32) + b3


if __name__ == "__main__":
    # Small shapes consistent with the module's forward. batch is deliberately not a
    # multiple of the tile so the pad-and-slice path is exercised.
    batch = 20
    num_features = 32
    num_hidden_1 = 64
    num_hidden_2 = 64
    num_classes = 16

    key = jax.random.PRNGKey(0)
    kx, kp = jax.random.split(key)
    x = jax.random.normal(kx, (batch, num_features), jnp.float32)
    params = init_params(kp, num_features, num_hidden_1, num_hidden_2, num_classes)

    use_bf16_ep = default_bf16_epilogue()

    # Default large-tile path (TM is auto-capped so the grid still has >=2 steps here).
    out = mlp_forward(x, *params, bf16_epilogue=use_bf16_ep)
    out = jax.block_until_ready(out)
    assert out.shape == (batch, num_classes)

    # Also exercise a longer grid (tm=8 -> 3 steps, no batch padding at this size).
    out_small_tile = mlp_forward(x, *params, tm=8, bf16_epilogue=use_bf16_ep)
    out_small_tile = jax.block_until_ready(out_small_tile)
    assert jnp.allclose(out, out_small_tile, atol=1e-5, rtol=1e-5)

    # Reference 1: same bf16-operand / f32-accumulate math as the kernel (tight tolerance).
    ref_bf16 = emulate_kernel_math(x, params, use_bf16_ep)
    assert jnp.allclose(out, ref_bf16, atol=2e-3, rtol=2e-3)

    # Reference 2: full-f32 module semantics (loose tolerance for the bf16 operands).
    w1, b1, w2, b2, w3, b3 = params
    rf = jnp.maximum(x @ w1 + b1, 0.0)
    rf = jnp.maximum(rf @ w2 + b2, 0.0)
    ref_f32 = rf @ w3 + b3
    assert jnp.allclose(out, ref_f32, atol=5e-2, rtol=5e-2)

    print("KERNEL_OK")
</pallas_src>

<mosaic_0001>
module attributes {stable_mosaic.version = 11 : i64} {
  func.func @mlp_kernel(%arg0: i32, %arg1: memref<16x32xf32, #tpu.memory_space<vmem>>, %arg2: memref<32x128xbf16, #tpu.memory_space<vmem>>, %arg3: memref<1x128xf32, #tpu.memory_space<vmem>>, %arg4: memref<128x128xbf16, #tpu.memory_space<vmem>>, %arg5: memref<1x128xf32, #tpu.memory_space<vmem>>, %arg6: memref<128x128xbf16, #tpu.memory_space<vmem>>, %arg7: memref<1x128xf32, #tpu.memory_space<vmem>>, %arg8: memref<16x128xf32, #tpu.memory_space<vmem>>) attributes {dimension_semantics = [#tpu.dimension_semantics<parallel>], iteration_bounds = array<i64: 2>, scalar_prefetch = 0 : i64, scratch_operands = 0 : i64, tpu.core_type = #tpu.core_type<tc>, window_params = [{transform_indices = @transform_0, window_bounds = array<i64: 16, 32>}, {pipeline_mode = #tpu.pipeline_mode<synchronous>, transform_indices = @transform_1, window_bounds = array<i64: 32, 128>}, {pipeline_mode = #tpu.pipeline_mode<synchronous>, transform_indices = @transform_2, window_bounds = array<i64: 1, 128>}, {pipeline_mode = #tpu.pipeline_mode<synchronous>, transform_indices = @transform_3, window_bounds = array<i64: 128, 128>}, {pipeline_mode = #tpu.pipeline_mode<synchronous>, transform_indices = @transform_4, window_bounds = array<i64: 1, 128>}, {pipeline_mode = #tpu.pipeline_mode<synchronous>, transform_indices = @transform_5, window_bounds = array<i64: 128, 128>}, {pipeline_mode = #tpu.pipeline_mode<synchronous>, transform_indices = @transform_6, window_bounds = array<i64: 1, 128>}, {transform_indices = @transform_7, window_bounds = array<i64: 16, 128>}]} {
    %c0 = arith.constant 0 : index
    %c0_0 = arith.constant 0 : index
    %0 = vector.load %arg1[%c0, %c0_0] : memref<16x32xf32, #tpu.memory_space<vmem>>, vector<16x32xf32>
    %1 = arith.truncf %0 : vector<16x32xf32> to vector<16x32xbf16>
    %c0_1 = arith.constant 0 : index
    %c0_2 = arith.constant 0 : index
    %2 = vector.load %arg2[%c0_1, %c0_2] : memref<32x128xbf16, #tpu.memory_space<vmem>>, vector<32x128xbf16>
    %cst = arith.constant dense<0.000000e+00> : vector<16x128xf32>
    %3 = tpu.matmul %1, %2, %cst {dimension_numbers = #tpu.dot_dimension_numbers<[1], [0], [0], [1], [0, 0, 1, 1], [], []>} : vector<16x32xbf16>, vector<32x128xbf16>, vector<16x128xf32> -> vector<16x128xf32>
    %c0_3 = arith.constant 0 : index
    %c0_4 = arith.constant 0 : index
    %4 = vector.load %arg3[%c0_3, %c0_4] : memref<1x128xf32, #tpu.memory_space<vmem>>, vector<1x128xf32>
    %5 = vector.broadcast %4 : vector<1x128xf32> to vector<16x128xf32>
    %6 = arith.addf %3, %5 : vector<16x128xf32>
    %cst_5 = arith.constant 0.000000e+00 : f32
    %7 = vector.broadcast %cst_5 : f32 to vector<16x128xf32>
    %8 = arith.maximumf %6, %7 : vector<16x128xf32>
    %9 = arith.truncf %8 : vector<16x128xf32> to vector<16x128xbf16>
    %c0_6 = arith.constant 0 : index
    %c0_7 = arith.constant 0 : index
    %10 = vector.load %arg4[%c0_6, %c0_7] : memref<128x128xbf16, #tpu.memory_space<vmem>>, vector<128x128xbf16>
    %cst_8 = arith.constant dense<0.000000e+00> : vector<16x128xf32>
    %11 = tpu.matmul %9, %10, %cst_8 {dimension_numbers = #tpu.dot_dimension_numbers<[1], [0], [0], [1], [0, 0, 1, 1], [], []>} : vector<16x128xbf16>, vector<128x128xbf16>, vector<16x128xf32> -> vector<16x128xf32>
    %c0_9 = arith.constant 0 : index
    %c0_10 = arith.constant 0 : index
    %12 = vector.load %arg5[%c0_9, %c0_10] : memref<1x128xf32, #tpu.memory_space<vmem>>, vector<1x128xf32>
    %13 = vector.broadcast %12 : vector<1x128xf32> to vector<16x128xf32>
    %14 = arith.addf %11, %13 : vector<16x128xf32>
    %cst_11 = arith.constant 0.000000e+00 : f32
    %15 = vector.broadcast %cst_11 : f32 to vector<16x128xf32>
    %16 = arith.maximumf %14, %15 : vector<16x128xf32>
    %17 = arith.truncf %16 : vector<16x128xf32> to vector<16x128xbf16>
    %c0_12 = arith.constant 0 : index
    %c0_13 = arith.constant 0 : index
    %18 = vector.load %arg6[%c0_12, %c0_13] : memref<128x128xbf16, #tpu.memory_space<vmem>>, vector<128x128xbf16>
    %cst_14 = arith.constant dense<0.000000e+00> : vector<16x128xf32>
    %19 = tpu.matmul %17, %18, %cst_14 {dimension_numbers = #tpu.dot_dimension_numbers<[1], [0], [0], [1], [0, 0, 1, 1], [], []>} : vector<16x128xbf16>, vector<128x128xbf16>, vector<16x128xf32> -> vector<16x128xf32>
    %c0_15 = arith.constant 0 : index
    %c0_16 = arith.constant 0 : index
    %20 = vector.load %arg7[%c0_15, %c0_16] : memref<1x128xf32, #tpu.memory_space<vmem>>, vector<1x128xf32>
    %21 = vector.broadcast %20 : vector<1x128xf32> to vector<16x128xf32>
    %22 = arith.addf %19, %21 : vector<16x128xf32>
    %c0_17 = arith.constant 0 : index
    %c0_18 = arith.constant 0 : index
    %23 = vector.load %arg8[%c0_17, %c0_18] : memref<16x128xf32, #tpu.memory_space<vmem>>, vector<16x128xf32>
    tpu.vector_store %arg8[%c0_17, %c0_18], %22 {strides = array<i32>} : memref<16x128xf32, #tpu.memory_space<vmem>>, vector<16x128xf32>,
    return
  }
  func.func @transform_0(%arg0: i32) -> (i32, i32) {
    %c0_i32 = arith.constant 0 : i32
    %c0_i32_0 = arith.constant 0 : i32
    return %arg0, %c0_i32 : i32, i32
  }
  func.func @transform_1(%arg0: i32) -> (i32, i32) {
    %c0_i32 = arith.constant 0 : i32
    %c0_i32_0 = arith.constant 0 : i32
    %c0_i32_1 = arith.constant 0 : i32
    return %c0_i32, %c0_i32_0 : i32, i32
  }
  func.func @transform_2(%arg0: i32) -> (i32, i32) {
    %c0_i32 = arith.constant 0 : i32
    %c0_i32_0 = arith.constant 0 : i32
    %c0_i32_1 = arith.constant 0 : i32
    return %c0_i32, %c0_i32_0 : i32, i32
  }
  func.func @transform_3(%arg0: i32) -> (i32, i32) {
    %c0_i32 = arith.constant 0 : i32
    %c0_i32_0 = arith.constant 0 : i32
    %c0_i32_1 = arith.constant 0 : i32
    return %c0_i32, %c0_i32_0 : i32, i32
  }
  func.func @transform_4(%arg0: i32) -> (i32, i32) {
    %c0_i32 = arith.constant 0 : i32
    %c0_i32_0 = arith.constant 0 : i32
    %c0_i32_1 = arith.constant 0 : i32
    return %c0_i32, %c0_i32_0 : i32, i32
  }
  func.func @transform_5(%arg0: i32) -> (i32, i32) {
    %c0_i32 = arith.constant 0 : i32
    %c0_i32_0 = arith.constant 0 : i32
    %c0_i32_1 = arith.constant 0 : i32
    return %c0_i32, %c0_i32_0 : i32, i32
  }
  func.func @transform_6(%arg0: i32) -> (i32, i32) {
    %c0_i32 = arith.constant 0 : i32
    %c0_i32_0 = arith.constant 0 : i32
    %c0_i32_1 = arith.constant 0 : i32
    return %c0_i32, %c0_i32_0 : i32, i32
  }
  func.func @transform_7(%arg0: i32) -> (i32, i32) {
    %c0_i32 = arith.constant 0 : i32
    %c0_i32_0 = arith.constant 0 : i32
    return %arg0, %c0_i32 : i32, i32
  }
}

</mosaic_0001>

<llo_original>
// kernel: mlp_forward.1
$region0: #{mlp_forward.1}
  #allocation0 [shape = 'u32[]', space=smem, size = 0x4, offset = 0x4, fixed_abs, tag = 'smem constant byte address 0x4 - core index']
  #allocation1 [shape = 'u32[144,128]{1,0:T(1,128)}', space=vmem, size = 0x12000, scoped, tag = 'internal scratch']
  %s0 = inlined_call_operand.vmem [shape: f32[32,32], index: 0, kind: input, shape index: {}]
  %s1 = inlined_call_operand.vmem [shape: bf16[32,128], index: 1, kind: input, shape index: {}]
  %s2 = inlined_call_operand.vmem [shape: f32[1,128], index: 2, kind: input, shape index: {}]
  %s3 = inlined_call_operand.vmem [shape: bf16[128,128], index: 3, kind: input, shape index: {}]
  %s4 = inlined_call_operand.vmem [shape: f32[1,128], index: 4, kind: input, shape index: {}]
  %s5 = inlined_call_operand.vmem [shape: bf16[128,128], index: 5, kind: input, shape index: {}]
  %s6 = inlined_call_operand.vmem [shape: f32[1,128], index: 6, kind: input, shape index: {}]
  %s7 = inlined_call_operand.vmem [shape: f32[32,128], index: 7, kind: output, shape index: {}]
  %s8 = sld [smem:[#allocation0]]
  $region61: #{mlp_forward.1} parent=0
    _
  %s10 = ssub.s32 1, %s8
  %s11 = scalar_select 0, %s10, %s8
  loop: start=0, step=1, limit=4
  $region2: #{mlp_forward.1} parent=0 // loop_pre_header
    _
  $region3: #{mlp_forward.1} parent=0 // loop_header
    %s13 = sphi 0, %s17
    %p14 = scmp.ge.s32.totalorder %s13, 4
    %s23 = sphi 0, %s25
    %s26 = sphi 0, %s23
    %s27 = sphi 0, %s26
    %s43 = sphi 0, %s27
    %s47 = sphi 0, %s47
    %s49 = sphi 0, %s47
    %s50 = sphi 0, %s49
    %s64 = sphi 0, %s50
    %s68 = sphi 0, %s68
    %s70 = sphi 0, %s68
    %s71 = sphi 0, %s70
    %s85 = sphi 0, %s71
    %s89 = sphi 0, %s89
    %s91 = sphi 0, %s89
    %s92 = sphi 0, %s91
    %s106 = sphi 0, %s92
    %s110 = sphi 0, %s110
    %s112 = sphi 0, %s110
    %s113 = sphi 0, %s112
    %s127 = sphi 0, %s113
    %s131 = sphi 0, %s131
    %s133 = sphi 0, %s131
    %s134 = sphi 0, %s133
    %s148 = sphi 0, %s134
    %s152 = sphi 0, %s152
    %s154 = sphi 0, %s152
    %s155 = sphi 0, %s154
    %s169 = sphi 0, %s155
    %s175 = sphi 0, %s177
    %s178 = sphi 0, %s175
    %s179 = sphi 0, %s178
    %s195 = sphi 0, %s179
  $region4: #{mlp_forward.1} parent=0 // loop_header_branch
    %16 = sbr.rel (%p14) target = $region8
  $region5: #{mlp_forward.1} parent=0 // loop_body
    %s18 = ssub.s32 %s13, 1
    %s19 = ssub.s32 %s13, 2
    %s20 = sadd.s32 %s13, 1
    %s21 = ssub.s32 %s13, %s20
    %p22 = scmp.eq.s32.totalorder %s21, 0
    %s24 = sadd.s32 %s23, 1
    %s25 = scalar_select %p22, %s23, %s24
    %p28 = pneg %p22
    %p29 = scmp.eq.s32.totalorder %s13, 1
    %p30 = por %p28, %p29
    %p31 = scmp.ne.s32.totalorder %s23, %s26
    %p32 = scmp.eq.s32.totalorder %s13, 0
    %p33 = por %p31, %p32
    %p34 = scmp.ne.s32.totalorder %s23, %s26
    %p35 = scmp.eq.s32.totalorder %s18, 1
    %p36 = por %p34, %p35
    %p37 = scmp.ne.s32.totalorder %s26, %s27
    %p38 = scmp.eq.s32.totalorder %s18, 0
    %p39 = por %p37, %p38
    %p40 = scmp.ne.s32.totalorder %s26, %s27
    %p41 = scmp.eq.s32.totalorder %s19, 1
    %p42 = por %p40, %p41
    %p44 = scmp.ne.s32.totalorder %s27, %s43
    %p45 = scmp.eq.s32.totalorder %s19, 0
    %p46 = por %p44, %p45
    %s48 = sadd.s32 %s47, 1
    %p51 = scmp.eq.s32.totalorder %s13, 1
    %p52 = scmp.ne.s32.totalorder %s47, %s49
    %p53 = scmp.eq.s32.totalorder %s13, 0
    %p54 = por %p52, %p53
    %p55 = scmp.ne.s32.totalorder %s47, %s49
    %p56 = scmp.eq.s32.totalorder %s18, 1
    %p57 = por %p55, %p56
    %p58 = scmp.ne.s32.totalorder %s49, %s50
    %p59 = scmp.eq.s32.totalorder %s18, 0
    %p60 = por %p58, %p59
    %p61 = scmp.ne.s32.totalorder %s49, %s50
    %p62 = scmp.eq.s32.totalorder %s19, 1
    %p63 = por %p61, %p62
    %p65 = scmp.ne.s32.totalorder %s50, %s64
    %p66 = scmp.eq.s32.totalorder %s19, 0
    %p67 = por %p65, %p66
    %s69 = sadd.s32 %s68, 1
    %p72 = scmp.eq.s32.totalorder %s13, 1
    %p73 = scmp.ne.s32.totalorder %s68, %s70
    %p74 = scmp.eq.s32.totalorder %s13, 0
    %p75 = por %p73, %p74
    %p76 = scmp.ne.s32.totalorder %s68, %s70
    %p77 = scmp.eq.s32.totalorder %s18, 1
    %p78 = por %p76, %p77
    %p79 = scmp.ne.s32.totalorder %s70, %s71
    %p80 = scmp.eq.s32.totalorder %s18, 0
    %p81 = por %p79, %p80
    %p82 = scmp.ne.s32.totalorder %s70, %s71
    %p83 = scmp.eq.s32.totalorder %s19, 1
    %p84 = por %p82, %p83
    %p86 = scmp.ne.s32.totalorder %s71, %s85
    %p87 = scmp.eq.s32.totalorder %s19, 0
    %p88 = por %p86, %p87
    %s90 = sadd.s32 %s89, 1
    %p93 = scmp.eq.s32.totalorder %s13, 1
    %p94 = scmp.ne.s32.totalorder %s89, %s91
    %p95 = scmp.eq.s32.totalorder %s13, 0
    %p96 = por %p94, %p95
    %p97 = scmp.ne.s32.totalorder %s89, %s91
    %p98 = scmp.eq.s32.totalorder %s18, 1
    %p99 = por %p97, %p98
    %p100 = scmp.ne.s32.totalorder %s91, %s92
    %p101 = scmp.eq.s32.totalorder %s18, 0
    %p102 = por %p100, %p101
    %p103 = scmp.ne.s32.totalorder %s91, %s92
    %p104 = scmp.eq.s32.totalorder %s19, 1
    %p105 = por %p103, %p104
    %p107 = scmp.ne.s32.totalorder %s92, %s106
    %p108 = scmp.eq.s32.totalorder %s19, 0
    %p109 = por %p107, %p108
    %s111 = sadd.s32 %s110, 1
    %p114 = scmp.eq.s32.totalorder %s13, 1
    %p115 = scmp.ne.s32.totalorder %s110, %s112
    %p116 = scmp.eq.s32.totalorder %s13, 0
    %p117 = por %p115, %p116
    %p118 = scmp.ne.s32.totalorder %s110, %s112
    %p119 = scmp.eq.s32.totalorder %s18, 1
    %p120 = por %p118, %p119
    %p121 = scmp.ne.s32.totalorder %s112, %s113
    %p122 = scmp.eq.s32.totalorder %s18, 0
    %p123 = por %p121, %p122
    %p124 = scmp.ne.s32.totalorder %s112, %s113
    %p125 = scmp.eq.s32.totalorder %s19, 1
    %p126 = por %p124, %p125
    %p128 = scmp.ne.s32.totalorder %s113, %s127
    %p129 = scmp.eq.s32.totalorder %s19, 0
    %p130 = por %p128, %p129
    %s132 = sadd.s32 %s131, 1
    %p135 = scmp.eq.s32.totalorder %s13, 1
    %p136 = scmp.ne.s32.totalorder %s131, %s133
    %p137 = scmp.eq.s32.totalorder %s13, 0
    %p138 = por %p136, %p137
    %p139 = scmp.ne.s32.totalorder %s131, %s133
    %p140 = scmp.eq.s32.totalorder %s18, 1
    %p141 = por %p139, %p140
    %p142 = scmp.ne.s32.totalorder %s133, %s134
    %p143 = scmp.eq.s32.totalorder %s18, 0
    %p144 = por %p142, %p143
    %p145 = scmp.ne.s32.totalorder %s133, %s134
    %p146 = scmp.eq.s32.totalorder %s19, 1
    %p147 = por %p145, %p146
    %p149 = scmp.ne.s32.totalorder %s134, %s148
    %p150 = scmp.eq.s32.totalorder %s19, 0
    %p151 = por %p149, %p150
    %s153 = sadd.s32 %s152, 1
    %p156 = scmp.eq.s32.totalorder %s13, 1
    %p157 = scmp.ne.s32.totalorder %s152, %s154
    %p158 = scmp.eq.s32.totalorder %s13, 0
    %p159 = por %p157, %p158
    %p160 = scmp.ne.s32.totalorder %s152, %s154
    %p161 = scmp.eq.s32.totalorder %s18, 1
    %p162 = por %p160, %p161
    %p163 = scmp.ne.s32.totalorder %s154, %s155
    %p164 = scmp.eq.s32.totalorder %s18, 0
    %p165 = por %p163, %p164
    %p166 = scmp.ne.s32.totalorder %s154, %s155
    %p167 = scmp.eq.s32.totalorder %s19, 1
    %p168 = por %p166, %p167
    %p170 = scmp.ne.s32.totalorder %s155, %s169
    %p171 = scmp.eq.s32.totalorder %s19, 0
    %p172 = por %p170, %p171
    %s173 = ssub.s32 %s13, %s20
    %p174 = scmp.eq.s32.totalorder %s173, 0
    %s176 = sadd.s32 %s175, 1
    %s177 = scalar_select %p174, %s175, %s176
    %p180 = pneg %p174
    %p181 = scmp.eq.s32.totalorder %s13, 1
    %p182 = por %p180, %p181
    %p183 = scmp.ne.s32.totalorder %s175, %s178
    %p184 = scmp.eq.s32.totalorder %s13, 0
    %p185 = por %p183, %p184
    %p186 = scmp.ne.s32.totalorder %s175, %s178
    %p187 = scmp.eq.s32.totalorder %s18, 1
    %p188 = por %p186, %p187
    %p189 = scmp.ne.s32.totalorder %s178, %s179
    %p190 = scmp.eq.s32.totalorder %s18, 0
    %p191 = por %p189, %p190
    %p192 = scmp.ne.s32.totalorder %s178, %s179
    %p193 = scmp.eq.s32.totalorder %s19, 1
    %p194 = por %p192, %p193
    %p196 = scmp.ne.s32.totalorder %s179, %s195
    %p197 = scmp.eq.s32.totalorder %s19, 0
    %p198 = por %p196, %p197
    %p199 = scmp.le.s32.totalorder 1, %s13
    %p200 = scmp.lt.s32.totalorder %s13, 3
    %p201 = pnand %p199, %p200
    %p202 = pneg %p201
    // Predicated region
    $region9: #{mlp_forward.1} parent=5 // pred_check
      _
    $region10: #{mlp_forward.1} parent=5 // pred_check_branch
      %204 = sbr.rel (%p201) target = $region12
    $region11: #{mlp_forward.1} parent=5 // pred_region
      %s205 = ssub.s32 %s13, 1
      // Predicated region
      $region13: #{mlp_forward.1} parent=11 // pred_check
        %p206 = pneg %p60
      $region14: #{mlp_forward.1} parent=11 // pred_check_branch
        %208 = sbr.rel (%p206) target = $region16
      $region15: #{mlp_forward.1} parent=11 // pred_region
        _
      $region16: #{mlp_forward.1} parent=11 // pred_fallthru
        _
      // Predicated region
      $region17: #{mlp_forward.1} parent=11 // pred_check
        %p209 = pneg %p81
      $region18: #{mlp_forward.1} parent=11 // pred_check_branch
        %211 = sbr.rel (%p209) target = $region20
      $region19: #{mlp_forward.1} parent=11 // pred_region
        _
      $region20: #{mlp_forward.1} parent=11 // pred_fallthru
        _
      // Predicated region
      $region21: #{mlp_forward.1} parent=11 // pred_check
        %p212 = pneg %p102
      $region22: #{mlp_forward.1} parent=11 // pred_check_branch
        %214 = sbr.rel (%p212) target = $region24
      $region23: #{mlp_forward.1} parent=11 // pred_region
        _
      $region24: #{mlp_forward.1} parent=11 // pred_fallthru
        _
      // Predicated region
      $region25: #{mlp_forward.1} parent=11 // pred_check
        %p215 = pneg %p123
      $region26: #{mlp_forward.1} parent=11 // pred_check_branch
        %217 = sbr.rel (%p215) target = $region28
      $region27: #{mlp_forward.1} parent=11 // pred_region
        _
      $region28: #{mlp_forward.1} parent=11 // pred_fallthru
        _
      // Predicated region
      $region29: #{mlp_forward.1} parent=11 // pred_check
        %p218 = pneg %p144
      $region30: #{mlp_forward.1} parent=11 // pred_check_branch
        %220 = sbr.rel (%p218) target = $region32
      $region31: #{mlp_forward.1} parent=11 // pred_region
        _
      $region32: #{mlp_forward.1} parent=11 // pred_fallthru
        _
      // Predicated region
      $region33: #{mlp_forward.1} parent=11 // pred_check
        %p221 = pneg %p165
      $region34: #{mlp_forward.1} parent=11 // pred_check_branch
        %223 = sbr.rel (%p221) target = $region36
      $region35: #{mlp_forward.1} parent=11 // pred_region
        _
      $region36: #{mlp_forward.1} parent=11 // pred_fallthru
        _
    $region12: #{mlp_forward.1} parent=5 // pred_fallthru
      _
    %p224 = scmp.lt.s32.totalorder %s13, 2
    // Predicated region
    $region37: #{mlp_forward.1} parent=5 // pred_check
      %p225 = pneg %p224
    $region38: #{mlp_forward.1} parent=5 // pred_check_branch
      %227 = sbr.rel (%p225) target = $region40
    $region39: #{mlp_forward.1} parent=5 // pred_region
      // Predicated region
      $region41: #{mlp_forward.1} parent=39 // pred_check
        %p228 = pneg %p33
      $region42: #{mlp_forward.1} parent=39 // pred_check_branch
        %230 = sbr.rel (%p228) target = $region44
      $region43: #{mlp_forward.1} parent=39 // pred_region
        %s231 = smul.u32 2, %s13
        %p232 = scmp.lt.s32.totalorder %s231, 3
        %s233 = scalar_select %p232, %s231, 3
        %s234 = smul.addr %s233, 8
        %s235 = scalar_lea.vmem %s0, %s234
        %s236 = smul.u32 2, %s13
      $region44: #{mlp_forward.1} parent=39 // pred_fallthru
        _
    $region40: #{mlp_forward.1} parent=5 // pred_fallthru
      _
    %p237 = scmp.le.s32.totalorder 1, %s13
    %p238 = scmp.lt.s32.totalorder %s13, 3
    %p239 = pnand %p237, %p238
    %p240 = pneg %p239
    // Predicated region
    $region45: #{mlp_forward.1} parent=5 // pred_check
      _
    $region46: #{mlp_forward.1} parent=5 // pred_check_branch
      %242 = sbr.rel (%p239) target = $region48
    $region47: #{mlp_forward.1} parent=5 // pred_region
      %s243 = ssub.s32 %s13, 1
      %s244 = smul.u32 2, %s18
      %p245 = scmp.lt.s32.totalorder %s244, 3
      %s246 = scalar_select %p245, %s244, 3
      %s247 = smul.addr %s246, 8
      %s248 = scalar_lea.vmem %s0, %s247
      %p249 = pneg %p39
      %p250 = pneg %p36
      %p251 = pneg %p60
      %p252 = pneg %p57
      %p253 = pneg %p81
      %p254 = pneg %p78
      %p255 = pneg %p102
      %p256 = pneg %p99
      %p257 = pneg %p123
      %p258 = pneg %p120
      %p259 = pneg %p144
      %p260 = pneg %p141
      %p261 = pneg %p165
      %p262 = pneg %p162
      %p263 = pneg %p191
      %p264 = pneg %p188
      %s265 = smul.u32 2, %s18
      %p266 = scmp.lt.s32.totalorder %s265, 3
      %s267 = scalar_select %p266, %s265, 3
      %s268 = smul.addr %s267, 8
      %s269 = scalar_lea.vmem %s7, %s268
      %s270 = smul.u32 2, %s18
      %p271 = scmp.lt.s32.totalorder %s270, 3
      %s272 = scalar_select %p271, %s270, 3
      %s273 = smul.addr %s272, 8
      %s274 = scalar_lea.vmem %s0, %s273
      %s275 = smul.u32 2, %s18
      %s276 = smul.u32 2, %s18
      %p277 = scmp.lt.s32.totalorder %s276, 3
      %s278 = scalar_select %p277, %s276, 3
      %s279 = smul.addr %s278, 8
      %s280 = scalar_lea.vmem %s7, %s279
      %s281 = smul.u32 2, %s18
      %v283 = vld [vmem:[%s274] sm:$0xff]
      %v284 = vld [vmem:[%s274 + $0x8] sm:$0xff]
      %v285 = vpack.c.bf16 %v284, %v283
      %v286 = vld [vmem:[%s1] sm:$0xf]
      %v287 = vld [vmem:[%s1 + $0x4] sm:$0xf]
      %v288 = vld [vmem:[%s1 + $0x8] sm:$0xf]
      %v289 = vld [vmem:[%s1 + $0xc] sm:$0xf]
      %v290 = vld [vmem:[%s2] sm:$0x1]
      %v292 = vlaneseq
      %v293 = vshrl.u32 %v292, 7
      %v294 = vsub.s32 0, %v293
      %v295 = vrot.slane %v290, %v294
      %v301 = vunpack.c.l.b16 %v286
      %v302 = vunpack.c.l.b16 %v287
      %v303 = vunpack.c.l.b16 %v288
      %v304 = vunpack.c.l.b16 %v289
      %v305 = vpack.c.b16 %v302, %v301
      %v306 = vpack.c.b16 %v304, %v303
      %vm309 = vcmask 261120
      %v311 = vsel %vm309, %v285, 0
      %313 = vmatprep.subr.bf16.mxu0 0
      %314 = vmatpush1.bf16.msra.mxu0 %v305
      %315 = vmatprep.subr.bf16.mxu0 0
      %316 = vmatpush1.bf16.msra.mxu0 %v306
      %317 = vmatprep.subr.bf16.mxu0 0
      %318 = vmatpush1.bf16.msra.mxu0 0
      %319 = vmatprep.subr.bf16.mxu0 0
      %320 = vmatpush1.bf16.msra.mxu0 0
      %321 = vmatprep.subr.bf16.mxu0 0
      %322 = vmatpush1.bf16.msra.mxu0 0
      %323 = vmatprep.subr.bf16.mxu0 0
      %324 = vmatpush1.bf16.msra.mxu0 0
      %325 = vmatprep.subr.bf16.mxu0 0
      %326 = vmatpush1.bf16.msra.mxu0 0
      %327 = vmatprep.subr.bf16.mxu0 0
      %328 = vmatpush1.bf16.msra.mxu0 0
      %329 = vmatprep.subr.bf16.mxu0 0
      %330 = vmatpush1.bf16.msra.mxu0 0
      %331 = vmatprep.subr.bf16.mxu0 0
      %332 = vmatpush1.bf16.msra.mxu0 0
      %333 = vmatprep.subr.bf16.mxu0 0
      %334 = vmatpush1.bf16.msra.mxu0 0
      %335 = vmatprep.subr.bf16.mxu0 0
      %336 = vmatpush1.bf16.msra.mxu0 0
      %337 = vmatprep.subr.bf16.mxu0 0
      %338 = vmatpush1.bf16.msra.mxu0 0
      %339 = vmatprep.subr.bf16.mxu0 0
      %340 = vmatpush1.bf16.msra.mxu0 0
      %341 = vmatprep.subr.bf16.mxu0 0
      %342 = vmatpush1.bf16.msra.mxu0 0
      %343 = vmatprep.subr.bf16.mxu0 0
      %344 = vmatpush1.bf16.msra.mxu0 0
      %345 = vmatprep.mubr.bf16.mxu0 0
      %346 = vmatmul.mubr.bf16.gmra.mrb[0].mxu0 %v311
      %v347 = vpop.f32.mrb[0].mxu0
      %v348 = vadd.f32 %v295, %v347
      %v349 = vpop.f32.mrb[0].mxu0
      %v350 = vpop.f32.mrb[0].mxu0
      %v351 = vadd.f32 %v295, %v350
      %v352 = vpop.f32.mrb[0].mxu0
      %353 = vdwg.mxu0
      %v354 = vmax.f32 %v348, 0.0
      %v355 = vmax.f32 %v351, 0.0
      %v356 = vpack.c.bf16 %v355, %v354
      %v357 = vld [vmem:[%s3] sm:$0xf]
      %v358 = vld [vmem:[%s3 + $0x4] sm:$0xf]
      %v359 = vld [vmem:[%s3 + $0x8] sm:$0xf]
      %v360 = vld [vmem:[%s3 + $0xc] sm:$0xf]
      %v361 = vld [vmem:[%s3 + $0x10] sm:$0xf]
      %v362 = vld [vmem:[%s3 + $0x14] sm:$0xf]
      %v363 = vld [vmem:[%s3 + $0x18] sm:$0xf]
      %v364 = vld [vmem:[%s3 + $0x1c] sm:$0xf]
      %v365 = vld [vmem:[%s3 + $0x20] sm:$0xf]
      %v366 = vld [vmem:[%s3 + $0x24] sm:$0xf]
      %v367 = vld [vmem:[%s3 + $0x28] sm:$0xf]
      %v368 = vld [vmem:[%s3 + $0x2c] sm:$0xf]
      %v369 = vld [vmem:[%s3 + $0x30] sm:$0xf]
      %v370 = vld [vmem:[%s3 + $0x34] sm:$0xf]
      %v371 = vld [vmem:[%s3 + $0x38] sm:$0xf]
      %v372 = vld [vmem:[%s3 + $0x3c] sm:$0xf]
      %v373 = vld [vmem:[%s4] sm:$0x1]
      %v375 = vlaneseq
      %v376 = vshrl.u32 %v375, 7
      %v377 = vsub.s32 0, %v376
      %v378 = vrot.slane %v373, %v377
      %v396 = vunpack.c.l.b16 %v357
      %v397 = vunpack.c.l.b16 %v358
      %v398 = vunpack.c.l.b16 %v359
      %v399 = vunpack.c.l.b16 %v360
      %v400 = vunpack.c.l.b16 %v361
      %v401 = vunpack.c.l.b16 %v362
      %v402 = vunpack.c.l.b16 %v363
      %v403 = vunpack.c.l.b16 %v364
      %v404 = vunpack.c.l.b16 %v365
      %v405 = vunpack.c.l.b16 %v366
      %v406 = vunpack.c.l.b16 %v367
      %v407 = vunpack.c.l.b16 %v368
      %v408 = vunpack.c.l.b16 %v369
      %v409 = vunpack.c.l.b16 %v370
      %v410 = vunpack.c.l.b16 %v371
      %v411 = vunpack.c.l.b16 %v372
      %v412 = vpack.c.b16 %v397, %v396
      %v413 = vpack.c.b16 %v399, %v398
      %v414 = vpack.c.b16 %v401, %v400
      %v415 = vpack.c.b16 %v403, %v402
      %v416 = vpack.c.b16 %v405, %v404
      %v417 = vpack.c.b16 %v407, %v406
      %v418 = vpack.c.b16 %v409, %v408
      %v419 = vpack.c.b16 %v411, %v410
      %428 = vmatprep.subr.bf16.mxu0 0
      %429 = vmatpush1.bf16.msra.mxu0 %v412
      %430 = vmatprep.subr.bf16.mxu0 0
      %431 = vmatpush1.bf16.msra.mxu0 %v413
      %432 = vmatprep.subr.bf16.mxu0 0
      %433 = vmatpush1.bf16.msra.mxu0 %v414
      %434 = vmatprep.subr.bf16.mxu0 0
      %435 = vmatpush1.bf16.msra.mxu0 %v415
      %436 = vmatprep.subr.bf16.mxu0 0
      %437 = vmatpush1.bf16.msra.mxu0 %v416
      %438 = vmatprep.subr.bf16.mxu0 0
      %439 = vmatpush1.bf16.msra.mxu0 %v417
      %440 = vmatprep.subr.bf16.mxu0 0
      %441 = vmatpush1.bf16.msra.mxu0 %v418
      %442 = vmatprep.subr.bf16.mxu0 0
      %443 = vmatpush1.bf16.msra.mxu0 %v419
      %444 = vmatprep.subr.bf16.mxu0 0
      %445 = vmatpush1.bf16.msra.mxu0 0
      %446 = vmatprep.subr.bf16.mxu0 0
      %447 = vmatpush1.bf16.msra.mxu0 0
      %448 = vmatprep.subr.bf16.mxu0 0
      %449 = vmatpush1.bf16.msra.mxu0 0
      %450 = vmatprep.subr.bf16.mxu0 0
      %451 = vmatpush1.bf16.msra.mxu0 0
      %452 = vmatprep.subr.bf16.mxu0 0
      %453 = vmatpush1.bf16.msra.mxu0 0
      %454 = vmatprep.subr.bf16.mxu0 0
      %455 = vmatpush1.bf16.msra.mxu0 0
      %456 = vmatprep.subr.bf16.mxu0 0
      %457 = vmatpush1.bf16.msra.mxu0 0
      %458 = vmatprep.subr.bf16.mxu0 0
      %459 = vmatpush1.bf16.msra.mxu0 0
      %460 = vmatprep.mubr.bf16.mxu0 0
      %461 = vmatmul.mubr.bf16.gmra.mrb[0].mxu0 %v356
      %v462 = vpop.f32.mrb[0].mxu0
      %v463 = vadd.f32 %v378, %v462
      %v464 = vpop.f32.mrb[0].mxu0
      %v465 = vpop.f32.mrb[0].mxu0
      %v466 = vadd.f32 %v378, %v465
      %v467 = vpop.f32.mrb[0].mxu0
      %468 = vdwg.mxu0
      %v469 = vmax.f32 %v463, 0.0
      %v470 = vmax.f32 %v466, 0.0
      %v471 = vpack.c.bf16 %v470, %v469
      %v472 = vld [vmem:[%s5] sm:$0xf]
      %v473 = vld [vmem:[%s5 + $0x4] sm:$0xf]
      %v474 = vld [vmem:[%s5 + $0x8] sm:$0xf]
      %v475 = vld [vmem:[%s5 + $0xc] sm:$0xf]
      %v476 = vld [vmem:[%s5 + $0x10] sm:$0xf]
      %v477 = vld [vmem:[%s5 + $0x14] sm:$0xf]
      %v478 = vld [vmem:[%s5 + $0x18] sm:$0xf]
      %v479 = vld [vmem:[%s5 + $0x1c] sm:$0xf]
      %v480 = vld [vmem:[%s5 + $0x20] sm:$0xf]
      %v481 = vld [vmem:[%s5 + $0x24] sm:$0xf]
      %v482 = vld [vmem:[%s5 + $0x28] sm:$0xf]
      %v483 = vld [vmem:[%s5 + $0x2c] sm:$0xf]
      %v484 = vld [vmem:[%s5 + $0x30] sm:$0xf]
      %v485 = vld [vmem:[%s5 + $0x34] sm:$0xf]
      %v486 = vld [vmem:[%s5 + $0x38] sm:$0xf]
      %v487 = vld [vmem:[%s5 + $0x3c] sm:$0xf]
      %v488 = vld [vmem:[%s6] sm:$0x1]
      %v490 = vlaneseq
      %v491 = vshrl.u32 %v490, 7
      %v492 = vsub.s32 0, %v491
      %v493 = vrot.slane %v488, %v492
      %v511 = vunpack.c.l.b16 %v472
      %v512 = vunpack.c.l.b16 %v473
      %v513 = vunpack.c.l.b16 %v474
      %v514 = vunpack.c.l.b16 %v475
      %v515 = vunpack.c.l.b16 %v476
      %v516 = vunpack.c.l.b16 %v477
      %v517 = vunpack.c.l.b16 %v478
      %v518 = vunpack.c.l.b16 %v479
      %v519 = vunpack.c.l.b16 %v480
      %v520 = vunpack.c.l.b16 %v481
      %v521 = vunpack.c.l.b16 %v482
      %v522 = vunpack.c.l.b16 %v483
      %v523 = vunpack.c.l.b16 %v484
      %v524 = vunpack.c.l.b16 %v485
      %v525 = vunpack.c.l.b16 %v486
      %v526 = vunpack.c.l.b16 %v487
      %v527 = vpack.c.b16 %v512, %v511
      %v528 = vpack.c.b16 %v514, %v513
      %v529 = vpack.c.b16 %v516, %v515
      %v530 = vpack.c.b16 %v518, %v517
      %v531 = vpack.c.b16 %v520, %v519
      %v532 = vpack.c.b16 %v522, %v521
      %v533 = vpack.c.b16 %v524, %v523
      %v534 = vpack.c.b16 %v526, %v525
      %543 = vmatprep.subr.bf16.mxu0 0
      %544 = vmatpush1.bf16.msra.mxu0 %v527
      %545 = vmatprep.subr.bf16.mxu0 0
      %546 = vmatpush1.bf16.msra.mxu0 %v528
      %547 = vmatprep.subr.bf16.mxu0 0
      %548 = vmatpush1.bf16.msra.mxu0 %v529
      %549 = vmatprep.subr.bf16.mxu0 0
      %550 = vmatpush1.bf16.msra.mxu0 %v530
      %551 = vmatprep.subr.bf16.mxu0 0
      %552 = vmatpush1.bf16.msra.mxu0 %v531
      %553 = vmatprep.subr.bf16.mxu0 0
      %554 = vmatpush1.bf16.msra.mxu0 %v532
      %555 = vmatprep.subr.bf16.mxu0 0
      %556 = vmatpush1.bf16.msra.mxu0 %v533
      %557 = vmatprep.subr.bf16.mxu0 0
      %558 = vmatpush1.bf16.msra.mxu0 %v534
      %559 = vmatprep.subr.bf16.mxu0 0
      %560 = vmatpush1.bf16.msra.mxu0 0
      %561 = vmatprep.subr.bf16.mxu0 0
      %562 = vmatpush1.bf16.msra.mxu0 0
      %563 = vmatprep.subr.bf16.mxu0 0
      %564 = vmatpush1.bf16.msra.mxu0 0
      %565 = vmatprep.subr.bf16.mxu0 0
      %566 = vmatpush1.bf16.msra.mxu0 0
      %567 = vmatprep.subr.bf16.mxu0 0
      %568 = vmatpush1.bf16.msra.mxu0 0
      %569 = vmatprep.subr.bf16.mxu0 0
      %570 = vmatpush1.bf16.msra.mxu0 0
      %571 = vmatprep.subr.bf16.mxu0 0
      %572 = vmatpush1.bf16.msra.mxu0 0
      %573 = vmatprep.subr.bf16.mxu0 0
      %574 = vmatpush1.bf16.msra.mxu0 0
      %575 = vmatprep.mubr.bf16.mxu0 0
      %576 = vmatmul.mubr.bf16.gmra.mrb[0].mxu0 %v471
      %v577 = vpop.f32.mrb[0].mxu0
      %v578 = vadd.f32 %v493, %v577
      %v579 = vpop.f32.mrb[0].mxu0
      %v580 = vpop.f32.mrb[0].mxu0
      %v581 = vadd.f32 %v493, %v580
      %v582 = vpop.f32.mrb[0].mxu0
      %583 = vdwg.mxu0
      %584 = vst [vmem:[%s280] sm:$0xff] %v578
      %585 = vst [vmem:[%s280 + $0x8] sm:$0xff] %v581
      %s586 = smul.u32 2, %s18
      %p587 = scmp.lt.s32.totalorder %s586, 3
      %s588 = scalar_select %p587, %s586, 3
      %s589 = smul.addr %s588, 8
      %s590 = scalar_lea.vmem %s7, %s589
      // Predicated region
      $region49: #{mlp_forward.1} parent=47 // pred_check
        %p591 = pneg %p188
      $region50: #{mlp_forward.1} parent=47 // pred_check_branch
        %593 = sbr.rel (%p591) target = $region52
      $region51: #{mlp_forward.1} parent=47 // pred_region
        %s594 = smul.u32 2, %s18
      $region52: #{mlp_forward.1} parent=47 // pred_fallthru
        _
    $region48: #{mlp_forward.1} parent=5 // pred_fallthru
      _
    %p595 = scmp.le.s32.totalorder 2, %s13
    // Predicated region
    $region53: #{mlp_forward.1} parent=5 // pred_check
      %p596 = pneg %p595
    $region54: #{mlp_forward.1} parent=5 // pred_check_branch
      %598 = sbr.rel (%p596) target = $region56
    $region55: #{mlp_forward.1} parent=5 // pred_region
      %s599 = ssub.s32 %s13, 2
      // Predicated region
      $region57: #{mlp_forward.1} parent=55 // pred_check
        %p600 = pneg %p194
      $region58: #{mlp_forward.1} parent=55 // pred_check_branch
        %602 = sbr.rel (%p600) target = $region60
      $region59: #{mlp_forward.1} parent=55 // pred_region
        %s603 = smul.u32 2, %s19
        %p604 = scmp.lt.s32.totalorder %s603, 3
        %s605 = scalar_select %p604, %s603, 3
        %s606 = smul.addr %s605, 8
        %s607 = scalar_lea.vmem %s7, %s606
      $region60: #{mlp_forward.1} parent=55 // pred_fallthru
        _
    $region56: #{mlp_forward.1} parent=5 // pred_fallthru
      _
  $region6: #{mlp_forward.1} parent=0 // loop_footer
    %s17 = sadd.s32 1, %s13
  $region7: #{mlp_forward.1} parent=0 // loop_footer_branch
    %12 = sbr.rel target = $region3
  $region8: #{mlp_forward.1} parent=0 // loop_exit
    _

</llo_original>
